<compile_context>
chip_gen: v6e
topology: v6e:2x2x1
jax: 0.10.0
libtpu: 0.0.40
codegen_flags: <defaults>
</compile_context>

<pallas_src>
import jax
import jax.numpy as jnp
import numpy as np
from jax import lax
from jax.experimental import pallas as pl
from jax.experimental.pallas import tpu as pltpu


def _cosine_similarity_kernel(x_ref, y_ref, sims_ref):
    """Fused row-wise cosine similarity for one (tb, H) batch tile."""
    x = x_ref[...].astype(jnp.float32)      # (tb, H), upcast in-register
    y = y_ref[...].astype(jnp.float32)

    # F.normalize(p=2, dim=1) clamps the norm at eps=1e-12, i.e.
    #   cos = (x.y) / (max(|x|, eps) * max(|y|, eps))
    #       = (x.y) * rsqrt(max(|x|^2, eps^2)) * rsqrt(max(|y|^2, eps^2))
    eps_sq = jnp.float32(1e-24)
    ss_x = jnp.sum(x * x, axis=1)           # (tb,)
    ss_y = jnp.sum(y * y, axis=1)
    ss_xy = jnp.sum(x * y, axis=1)
    # TODO(synk): if v7x profiling shows the VALU slot binding (not HBM), move
    # the three row reductions onto the idle MXU (einsum against a ones matrix
    # with preferred_element_type=f32).
    inv_nx = lax.rsqrt(jnp.maximum(ss_x, eps_sq))   # EUP slot
    inv_ny = lax.rsqrt(jnp.maximum(ss_y, eps_sq))
    # Single sublane->lane relayout per step, confined to the sims store.
    sims_ref[...] = (ss_xy * inv_nx * inv_ny)[None, :]


def _vmem_capacity_bytes():
    try:
        return int(pltpu.get_tpu_info().vmem_capacity_bytes)
    except Exception:
        return 64 * 1024 * 1024     # conservative fallback (v7x per-TC VMEM)


def similarity_loss(x, y, labels, margin=0.1, *, max_rows=None):
    """Pallas implementation of SimilarityLoss.forward.

    Args:
      x:        [B, H] first graph embeddings (any float dtype; bf16 preferred)
      y:        [B, H] second graph embeddings
      labels:   [B]    target similarity scores
      margin:   unused by the reference forward pass (kept for parity)
      max_rows: optional cap on the batch tile (testing / tuning hook)

    Returns:
      (clipped_loss scalar f32, similarities [B] f32)
    """
    del margin    # nn.Parameter on the module, never used in forward()
    B, H = x.shape
    assert y.shape == (B, H) and labels.shape == (B,)

    # ---- generation-aware batch-tile sizing --------------------------------
    vmem_cap = _vmem_capacity_bytes()
    # Double-buffered x+y DMA window budget: bigger on 128 MiB parts.
    budget = (48 << 20) if vmem_cap >= (96 << 20) else (24 << 20)
    itemsize = jnp.dtype(x.dtype).itemsize
    bytes_per_row = 2 * 2 * H * itemsize          # 2 inputs x 2 pipeline bufs
    max_tb = budget // bytes_per_row
    if max_rows is not None:
        max_tb = min(max_tb, max_rows)
    if B <= max(max_tb, 128):
        tb = B                                    # single block == full dims
    else:
        # Multiple of 128 (lane dim of the (1, tb) sims block) and of 8.
        tb = max(128, (max_tb // 128) * 128)
        # TODO(synk): for extremely wide rows where even a 128-row tile
        # overflows VMEM, add a second "arbitrary" grid axis over H with a
        # (tb, 1) partial-sum scratch instead of raising the limit further.
    grid = (pl.cdiv(B, tb),)

    footprint = 2 * 2 * tb * H * itemsize + 2 * 2 * tb * 4   # in + out bufs
    vmem_limit = int(min(vmem_cap - (4 << 20),
                         max(footprint + (2 << 20), 16 << 20)))

    sims_row = pl.pallas_call(
        _cosine_similarity_kernel,
        out_shape=jax.ShapeDtypeStruct((1, B), jnp.float32),
        grid=grid,
        in_specs=[
            pl.BlockSpec((tb, H), lambda i: (i, 0)),    # x, native dtype
            pl.BlockSpec((tb, H), lambda i: (i, 0)),    # y, native dtype
        ],
        out_specs=pl.BlockSpec((1, tb), lambda i: (0, i)),   # lane-dense sims
        compiler_params=pltpu.CompilerParams(
            # No loop-carried state -> batch axis is parallel (v7x megacore).
            dimension_semantics=("parallel",),
            vmem_limit_bytes=vmem_limit,
        ),
    )(x, y)
    sims = sims_row[0]

    # ---- O(B) scalar tail in plain JAX (two-pass, matches torch exactly) ---
    labels_f = labels.astype(jnp.float32)
    nm1 = jnp.float32(B - 1)          # NOTE: B == 1 yields inf/nan, as torch
    sim_c = sims - jnp.mean(sims)
    lab_c = labels_f - jnp.mean(labels_f)
    sim_ss = jnp.sum(sim_c * sim_c)
    lab_ss = jnp.sum(lab_c * lab_c)
    sim_std = jnp.sqrt(sim_ss / nm1)
    lab_std = jnp.sqrt(lab_ss / nm1)
    correlation = jnp.sum(sim_c * lab_c) / (nm1 * sim_std * lab_std)
    pearson_loss = 1.0 - correlation
    mse = jnp.mean((sims - labels_f) ** 2)
    var = sim_ss / nm1                # torch.var default: unbiased (n-1)

    loss = 0.2 * pearson_loss + mse - 0.05 * var
    clipped_loss = jnp.clip(loss, -10.0, 10.0)

    # TODO(synk): TreeMatchingMetrics.compute_task_metrics is not defined in
    # the reference source; the metrics dict is omitted.
    return clipped_loss, sims


def _reference(x, y, labels):
    """Pure-JAX reference mirroring the torch module (for the sanity check)."""
    xf = x.astype(jnp.float32)
    yf = y.astype(jnp.float32)
    xn = xf / jnp.maximum(jnp.linalg.norm(xf, axis=1, keepdims=True), 1e-12)
    yn = yf / jnp.maximum(jnp.linalg.norm(yf, axis=1, keepdims=True), 1e-12)
    sims = jnp.sum(xn * yn, axis=1)
    lab = labels.astype(jnp.float32)
    n = sims.shape[0]
    sc = sims - sims.mean()
    lc = lab - lab.mean()
    sstd = jnp.sqrt(jnp.sum(sc * sc) / (n - 1))
    lstd = jnp.sqrt(jnp.sum(lc * lc) / (n - 1))
    corr = jnp.sum(sc * lc) / ((n - 1) * sstd * lstd)
    loss = (0.2 * (1.0 - corr) + jnp.mean((sims - lab) ** 2)
            - 0.05 * (jnp.sum(sc * sc) / (n - 1)))
    return jnp.clip(loss, -10.0, 10.0), sims


if __name__ == "__main__":
    key = jax.random.PRNGKey(0)
    kx, ky, kl, kx2, ky2, kl2 = jax.random.split(key, 6)

    # Small shapes consistent with the module: [batch, hidden] embeddings.
    batch, hidden = 8, 32
    x = jax.random.normal(kx, (batch, hidden), dtype=jnp.float32)
    y = jax.random.normal(ky, (batch, hidden), dtype=jnp.float32)
    labels = jax.random.uniform(kl, (batch,), dtype=jnp.float32,
                                minval=-1.0, maxval=1.0)

    loss, sims = similarity_loss(x, y, labels, margin=0.1)
    jax.block_until_ready((loss, sims))
    loss_ref, sims_ref = _reference(x, y, labels)
    np.testing.assert_allclose(np.asarray(sims), np.asarray(sims_ref),
                               rtol=1e-4, atol=1e-5)
    np.testing.assert_allclose(np.asarray(loss), np.asarray(loss_ref),
                               rtol=1e-3, atol=1e-4)

    # Exercise the multi-tile / ragged-tail path (no padding of x or y).
    b2, h2 = 300, 128
    x2 = jax.random.normal(kx2, (b2, h2), dtype=jnp.float32)
    y2 = jax.random.normal(ky2, (b2, h2), dtype=jnp.float32)
    l2 = jax.random.uniform(kl2, (b2,), dtype=jnp.float32,
                            minval=-1.0, maxval=1.0)
    loss2, sims2 = similarity_loss(x2, y2, l2, max_rows=128)
    jax.block_until_ready((loss2, sims2))
    loss2_ref, sims2_ref = _reference(x2, y2, l2)
    np.testing.assert_allclose(np.asarray(sims2), np.asarray(sims2_ref),
                               rtol=1e-4, atol=1e-5)
    np.testing.assert_allclose(np.asarray(loss2), np.asarray(loss2_ref),
                               rtol=1e-3, atol=1e-4)

    # Native-bf16 streaming path (halves HBM->VMEM DMA traffic).
    loss_bf16, sims_bf16 = similarity_loss(
        x.astype(jnp.bfloat16), y.astype(jnp.bfloat16), labels)
    jax.block_until_ready((loss_bf16, sims_bf16))

    print("KERNEL_OK")
</pallas_src>

<mosaic_0001>
module attributes {stable_mosaic.version = 11 : i64} {
  func.func @_cosine_similarity_kernel(%arg0: i32, %arg1: memref<8x32xf32, #tpu.memory_space<vmem>>, %arg2: memref<8x32xf32, #tpu.memory_space<vmem>>, %arg3: memref<1x8xf32, #tpu.memory_space<vmem>>) attributes {dimension_semantics = [#tpu.dimension_semantics<parallel>], iteration_bounds = array<i64: 1>, scalar_prefetch = 0 : i64, scratch_operands = 0 : i64, tpu.core_type = #tpu.core_type<tc>, window_params = [{transform_indices = @transform_0, window_bounds = array<i64: 8, 32>}, {transform_indices = @transform_1, window_bounds = array<i64: 8, 32>}, {transform_indices = @transform_2, window_bounds = array<i64: 1, 8>}]} {
    %c0 = arith.constant 0 : index
    %c0_0 = arith.constant 0 : index
    %0 = vector.load %arg1[%c0, %c0_0] : memref<8x32xf32, #tpu.memory_space<vmem>>, vector<8x32xf32>
    %c0_1 = arith.constant 0 : index
    %c0_2 = arith.constant 0 : index
    %1 = vector.load %arg2[%c0_1, %c0_2] : memref<8x32xf32, #tpu.memory_space<vmem>>, vector<8x32xf32>
    %2 = arith.mulf %0, %0 : vector<8x32xf32>
    %cst = arith.constant dense<0.000000e+00> : vector<8xf32>
    %3 = vector.multi_reduction <add>, %2, %cst [1] : vector<8x32xf32> to vector<8xf32>
    %4 = arith.mulf %1, %1 : vector<8x32xf32>
    %cst_3 = arith.constant dense<0.000000e+00> : vector<8xf32>
    %5 = vector.multi_reduction <add>, %4, %cst_3 [1] : vector<8x32xf32> to vector<8xf32>
    %6 = arith.mulf %0, %1 : vector<8x32xf32>
    %cst_4 = arith.constant dense<0.000000e+00> : vector<8xf32>
    %7 = vector.multi_reduction <add>, %6, %cst_4 [1] : vector<8x32xf32> to vector<8xf32>
    %cst_5 = arith.constant 1.000000e-24 : f32
    %8 = vector.broadcast %cst_5 : f32 to vector<8xf32>
    %9 = arith.maximumf %3, %8 : vector<8xf32>
    %10 = math.rsqrt %9 : vector<8xf32>
    %cst_6 = arith.constant 1.000000e-24 : f32
    %11 = vector.broadcast %cst_6 : f32 to vector<8xf32>
    %12 = arith.maximumf %5, %11 : vector<8xf32>
    %13 = math.rsqrt %12 : vector<8xf32>
    %14 = arith.mulf %7, %10 : vector<8xf32>
    %15 = arith.mulf %14, %13 : vector<8xf32>
    %16 = vector.shape_cast %15 : vector<8xf32> to vector<1x8xf32>
    %c0_7 = arith.constant 0 : index
    %c0_8 = arith.constant 0 : index
    %17 = vector.load %arg3[%c0_7, %c0_8] : memref<1x8xf32, #tpu.memory_space<vmem>>, vector<1x8xf32>
    tpu.vector_store %arg3[%c0_7, %c0_8], %16 {strides = array<i32>} : memref<1x8xf32, #tpu.memory_space<vmem>>, vector<1x8xf32>,
    return
  }
  func.func @transform_0(%arg0: i32) -> (i32, i32) {
    %c0_i32 = arith.constant 0 : i32
    %c0_i32_0 = arith.constant 0 : i32
    return %arg0, %c0_i32 : i32, i32
  }
  func.func @transform_1(%arg0: i32) -> (i32, i32) {
    %c0_i32 = arith.constant 0 : i32
    %c0_i32_0 = arith.constant 0 : i32
    return %arg0, %c0_i32 : i32, i32
  }
  func.func @transform_2(%arg0: i32) -> (i32, i32) {
    %c0_i32 = arith.constant 0 : i32
    %c0_i32_0 = arith.constant 0 : i32
    return %c0_i32, %arg0 : i32, i32
  }
}

</mosaic_0001>

<llo_original>
// kernel: tpu_custom_call.1
$region0: #{tpu_custom_call.1}
  #allocation0 [shape = 'u32[]', space=smem, size = 0x4, offset = 0x4, fixed_abs, tag = 'smem constant byte address 0x4 - core index']
  #allocation1 [shape = 'u32[144,128]{1,0:T(1,128)}', space=vmem, size = 0x12000, scoped, tag = 'internal scratch']
  %s0 = inlined_call_operand.hbm [shape: f32[8,32], index: 0, kind: input, shape index: {}]
  %s1 = inlined_call_operand.hbm [shape: f32[8,32], index: 1, kind: input, shape index: {}]
  %s2 = inlined_call_operand.hbm [shape: f32[1,8], index: 2, kind: output, shape index: {}]
  %s3 = sld [smem:[#allocation0]]
  $region26: #{tpu_custom_call.1} parent=0
    _
  %s5 = ssub.s32 1, %s3
  %s6 = scalar_select 0, %s5, %s3
  $region1: #{tpu_custom_call.1} parent=0
    #allocation2 [shape = 'u8[4096]{0}', space=vmem, size = 0x1000, scoped, tag = 'input window, operand 0, single buffered']
    #allocation3 [shape = 's32[1]{0}', space=sflag, size = 0x4, scoped, tag = 'scoped memory for tpu_custom_call.1']
    #allocation4 [shape = 's32[1]{0}', space=sflag, size = 0x4, scoped, tag = 'scoped memory for tpu_custom_call.1']
    #allocation5 [shape = 'u8[4096]{0}', space=vmem, size = 0x1000, scoped, tag = 'input window, operand 1, single buffered']
    #allocation6 [shape = 's32[1]{0}', space=sflag, size = 0x4, scoped, tag = 'scoped memory for tpu_custom_call.1']
    #allocation7 [shape = 'u8[512]{0}', space=vmem, size = 0x400, scoped, tag = 'output window, operand 0, single buffered']
    %7 = vsyncpa [#allocation3], 0
    %8 = vsyncpa [#allocation6], 0
    %9 = vsyncpa [#allocation4], 0
    // Predicated region
    $region2: #{tpu_custom_call.1} parent=1 // pred_check
      _
    $region3: #{tpu_custom_call.1} parent=1 // pred_check_branch
      %11 = sbr.rel (0) target = $region5
    $region4: #{tpu_custom_call.1} parent=1 // pred_region
      %s13 = ssub.s32 128, 128
      %14 = vsyncadd [#allocation3], %s13
      %s16 = sshll.u32 [#allocation2], 4
      %s17 = int_to_ptr.vmem [resolvable:$true] %s16
      %19 = dma.hbm_to_vmem [thread:$0]  %s0, 128, %s17, [#allocation3]
    $region5: #{tpu_custom_call.1} parent=1 // pred_fallthru
      _
    // Predicated region
    $region6: #{tpu_custom_call.1} parent=1 // pred_check
      _
    $region7: #{tpu_custom_call.1} parent=1 // pred_check_branch
      %21 = sbr.rel (0) target = $region9
    $region8: #{tpu_custom_call.1} parent=1 // pred_region
      %s23 = ssub.s32 128, 128
      %24 = vsyncadd [#allocation6], %s23
      %s26 = sshll.u32 [#allocation5], 4
      %s27 = int_to_ptr.vmem [resolvable:$true] %s26
      %29 = dma.hbm_to_vmem [thread:$0]  %s1, 128, %s27, [#allocation6]
    $region9: #{tpu_custom_call.1} parent=1 // pred_fallthru
      _
    // Predicated region
    $region10: #{tpu_custom_call.1} parent=1 // pred_check
      _
    $region11: #{tpu_custom_call.1} parent=1 // pred_check_branch
      %31 = sbr.rel (0) target = $region13
    $region12: #{tpu_custom_call.1} parent=1 // pred_region
      %32 = dma.done [#allocation3], 128
    $region13: #{tpu_custom_call.1} parent=1 // pred_fallthru
      _
    // Predicated region
    $region14: #{tpu_custom_call.1} parent=1 // pred_check
      _
    $region15: #{tpu_custom_call.1} parent=1 // pred_check_branch
      %34 = sbr.rel (0) target = $region17
    $region16: #{tpu_custom_call.1} parent=1 // pred_region
      %35 = dma.done [#allocation6], 128
    $region17: #{tpu_custom_call.1} parent=1 // pred_fallthru
      _
    %v36 = vld [vmem:[#allocation2] sm:$0xff]
    %v37 = vld [vmem:[#allocation5] sm:$0xff]
    %v38 = vmul.f32 %v36, %v36
    %vm39 = vcmask 261120
    %v40 = vsel %vm39, %v38, 0.0
    %41 = vadd.xlane.f32.xlu0 %v40
    %v42 = vpop.xlane.xlu0 %41
    %v43 = vmul.f32 %v37, %v37
    %v44 = vsel %vm39, %v43, 0.0
    %45 = vadd.xlane.f32.xlu0 %v44
    %v46 = vpop.xlane.xlu0 %45
    %v47 = vmul.f32 %v36, %v37
    %v48 = vsel %vm39, %v47, 0.0
    %49 = vadd.xlane.f32.xlu0 %v48
    %v50 = vpop.xlane.xlu0 %49
    %v51 = vmax.f32 %v42, 1e-24
    %v52 = vrsqrt.pop %v51
    %v53 = vmax.f32 %v46, 1e-24
    %v54 = vrsqrt.pop %v53
    %v55 = vmul.f32 %v50, %v52
    %v56 = vmul.f32 %v55, %v54
    %v58 = vlaneseq
    %v59 = vand.u32 %v58, 127
    %v60 = vlaneseq
    %v61 = vshrl.u32 %v60, 7
    %v62 = vsub.s32 %v59, %v61
    %v63 = vrot.slane %v56, %v62
    %vm65 = vcmask 57344
    %66 = vst.msk [vmem:[#allocation7] sm:$0x1] %vm65, %v63
    // Predicated region
    $region18: #{tpu_custom_call.1} parent=1 // pred_check
      _
    $region19: #{tpu_custom_call.1} parent=1 // pred_check_branch
      %68 = sbr.rel (0) target = $region21
    $region20: #{tpu_custom_call.1} parent=1 // pred_region
      %s70 = ssub.s32 16, 16
      %71 = vsyncadd [#allocation4], %s70
      %s73 = sshll.u32 [#allocation7], 4
      %s74 = int_to_ptr.vmem [resolvable:$true] %s73
      %76 = dma.vmem_to_hbm [thread:$0]  %s74, 16, %s2, [#allocation4]
    $region21: #{tpu_custom_call.1} parent=1 // pred_fallthru
      _
    // Predicated region
    $region22: #{tpu_custom_call.1} parent=1 // pred_check
      _
    $region23: #{tpu_custom_call.1} parent=1 // pred_check_branch
      %78 = sbr.rel (0) target = $region25
    $region24: #{tpu_custom_call.1} parent=1 // pred_region
      %79 = dma.done [#allocation4], 16
    $region25: #{tpu_custom_call.1} parent=1 // pred_fallthru
      _
    %80 = vsyncpa [#allocation3], 1
    %81 = vsyncpa [#allocation6], 1
    %82 = vsyncpa [#allocation4], 1

</llo_original>
